<compile_context>
chip_gen: v7x
topology: tpu7x:2x2x1
jax: 0.10.0
libtpu: 0.0.40
codegen_flags: <defaults>
</compile_context>

<pallas_src>
import jax
import jax.numpy as jnp
from jax.experimental import pallas as pl
from jax.experimental.pallas import tpu as pltpu


def conv1x1_tanh_kernel(x_ref, w_ref, b_ref, o_ref):
    # x_ref: (N, HWp)   w_ref: (Cblk, 1)   b_ref: (Cblk, 1)   o_ref: (N, Cblk, HWp)
    x = x_ref[...]                    # (N, HWp)
    w = w_ref[...][None, :, :]        # (1, Cblk, 1)  -- hoisted once per grid step
    b = b_ref[...][None, :, :]        # (1, Cblk, 1)
    # Single vectorized VPU mul+add over the whole block, tanh on the EUP,
    # one lane-dense streaming store (no per-batch loop, no re-emitted broadcasts).
    o_ref[...] = jnp.tanh(x[:, None, :] * w + b).astype(o_ref.dtype)


def conv1x1_tanh(x_nchw, weight, bias):
    """x_nchw: (N, 1, H, W); weight: (Cout, 1, 1, 1); bias: (Cout,) -> (N, Cout, H, W)"""
    N, Cin, H, W = x_nchw.shape
    assert Cin == 1, "ModelTanh's conv has in_channels=1"
    Cout = weight.shape[0]
    HW = H * W

    # Cin=1 folded away: pure reshape, no data movement.
    x_flat = x_nchw.reshape(N, HW)

    # Lane dim multiple of 128 -> unmasked vector stores.
    HW_pad = pl.cdiv(HW, 128) * 128
    if HW_pad != HW:
        x_flat = jnp.pad(x_flat, ((0, 0), (0, HW_pad - HW)))

    # Sublane-pad Cout to a multiple of 8 so every output (8,128) tile is full.
    C_pad = pl.cdiv(Cout, 8) * 8
    w_col = jnp.zeros((C_pad, 1), weight.dtype).at[:Cout].set(weight.reshape(Cout, 1))
    b_col = jnp.zeros((C_pad, 1), bias.dtype).at[:Cout].set(bias.reshape(Cout, 1))

    # Split Cout into blocks: >= 2 when possible so v7x megacore can run the
    # "parallel" axis on both TensorCores; grow the split if the (double-buffered)
    # output block would press the v7x scoped-VMEM budget.
    num_blocks = 2 if C_pad % 16 == 0 else 1
    VMEM_BUDGET = 16 * 1024 * 1024  # well under v7x 32 MiB scoped default
    while (2 * N * (C_pad // num_blocks) * HW_pad * 4 > VMEM_BUDGET
           and (C_pad // num_blocks) % 16 == 0):
        num_blocks *= 2
    C_blk = C_pad // num_blocks

    cost = pl.CostEstimate(
        flops=2 * N * Cout * HW,
        transcendentals=N * Cout * HW,
        bytes_accessed=(N * HW + 2 * Cout + N * Cout * HW) * 4,
    )

    out = pl.pallas_call(
        conv1x1_tanh_kernel,
        out_shape=jax.ShapeDtypeStruct((N, C_pad, HW_pad), x_nchw.dtype),
        grid_spec=pltpu.PrefetchScalarGridSpec(
            num_scalar_prefetch=0,
            grid=(num_blocks,),
            in_specs=[
                pl.BlockSpec((N, HW_pad), lambda c: (0, 0)),      # input reused by all blocks
                pl.BlockSpec((C_blk, 1), lambda c: (c, 0)),
                pl.BlockSpec((C_blk, 1), lambda c: (c, 0)),
            ],
            out_specs=pl.BlockSpec((N, C_blk, HW_pad), lambda c: (0, c, 0)),
        ),
        compiler_params=pltpu.CompilerParams(
            dimension_semantics=("parallel",),   # lets v7x shard the Cout blocks across its 2 TCs
        ),
        cost_estimate=cost,
    )(x_flat, w_col, b_col)

    # Strip the Cout / HW padding and do the free contiguous reshape to NCHW.
    out = out[:, :Cout, :HW]
    return out.reshape(N, Cout, H, W)


if __name__ == "__main__":
    key = jax.random.PRNGKey(0)
    kx, kw, kb = jax.random.split(key, 3)

    # Small shapes consistent with the module: Cin must be 1, Cout = 94.
    N, Cin, H, W = 2, 1, 16, 16
    Cout = 94

    x = jax.random.normal(kx, (N, Cin, H, W), dtype=jnp.float32)

    # Deterministic parameter init mimicking PyTorch Conv2d default (uniform in +/- 1/sqrt(fan_in)).
    fan_in = Cin * 1 * 1
    bound = 1.0 / (fan_in ** 0.5)
    weight = jax.random.uniform(kw, (Cout, Cin, 1, 1), dtype=jnp.float32,
                                minval=-bound, maxval=bound)
    bias = jax.random.uniform(kb, (Cout,), dtype=jnp.float32,
                              minval=-bound, maxval=bound)

    out = conv1x1_tanh(x, weight, bias)
    out = jax.block_until_ready(out)

    # Correctness check against a pure-JAX reference.
    ref = jnp.tanh(
        jnp.einsum("nchw,oc->nohw", x, weight.reshape(Cout, Cin)) + bias[None, :, None, None]
    )
    assert out.shape == (N, Cout, H, W)
    assert jnp.allclose(out, ref, atol=1e-5, rtol=1e-5)

    print("KERNEL_OK")
</pallas_src>

<mosaic_0001>
module attributes {stable_mosaic.version = 11 : i64} {
  func.func @conv1x1_tanh_kernel(%arg0: i32, %arg1: memref<2x256xf32, #tpu.memory_space<vmem>>, %arg2: memref<48x1xf32, #tpu.memory_space<vmem>>, %arg3: memref<48x1xf32, #tpu.memory_space<vmem>>, %arg4: memref<2x48x256xf32, #tpu.memory_space<vmem>>) attributes {dimension_semantics = [#tpu.dimension_semantics<parallel>], iteration_bounds = array<i64: 2>, scalar_prefetch = 0 : i64, scratch_operands = 0 : i64, tpu.core_type = #tpu.core_type<tc>, window_params = [{pipeline_mode = #tpu.pipeline_mode<synchronous>, transform_indices = @transform_0, window_bounds = array<i64: 2, 256>}, {transform_indices = @transform_1, window_bounds = array<i64: 48, 1>}, {transform_indices = @transform_2, window_bounds = array<i64: 48, 1>}, {transform_indices = @transform_3, window_bounds = array<i64: 2, 48, 256>}]} {
    %c0 = arith.constant 0 : index
    %c0_0 = arith.constant 0 : index
    %0 = vector.load %arg1[%c0, %c0_0] : memref<2x256xf32, #tpu.memory_space<vmem>>, vector<2x256xf32>
    %c0_1 = arith.constant 0 : index
    %c0_2 = arith.constant 0 : index
    %1 = vector.load %arg2[%c0_1, %c0_2] : memref<48x1xf32, #tpu.memory_space<vmem>>, vector<48x1xf32>
    %2 = vector.shape_cast %1 : vector<48x1xf32> to vector<1x48x1xf32>
    %c0_3 = arith.constant 0 : index
    %c0_4 = arith.constant 0 : index
    %3 = vector.load %arg3[%c0_3, %c0_4] : memref<48x1xf32, #tpu.memory_space<vmem>>, vector<48x1xf32>
    %4 = vector.shape_cast %3 : vector<48x1xf32> to vector<1x48x1xf32>
    %5 = vector.shape_cast %0 : vector<2x256xf32> to vector<2x1x256xf32>
    %6 = vector.broadcast %5 : vector<2x1x256xf32> to vector<2x48x256xf32>
    %7 = vector.broadcast %2 : vector<1x48x1xf32> to vector<2x48x256xf32>
    %8 = arith.mulf %6, %7 : vector<2x48x256xf32>
    %9 = vector.broadcast %4 : vector<1x48x1xf32> to vector<2x48x256xf32>
    %10 = arith.addf %8, %9 : vector<2x48x256xf32>
    %11 = math.tanh %10 : vector<2x48x256xf32>
    %c0_5 = arith.constant 0 : index
    %c0_6 = arith.constant 0 : index
    %c0_7 = arith.constant 0 : index
    %12 = vector.load %arg4[%c0_5, %c0_6, %c0_7] : memref<2x48x256xf32, #tpu.memory_space<vmem>>, vector<2x48x256xf32>
    tpu.vector_store %arg4[%c0_5, %c0_6, %c0_7], %11 {strides = array<i32>} : memref<2x48x256xf32, #tpu.memory_space<vmem>>, vector<2x48x256xf32>,
    return
  }
  func.func @transform_0(%arg0: i32) -> (i32, i32) {
    %c0_i32 = arith.constant 0 : i32
    %c0_i32_0 = arith.constant 0 : i32
    %c0_i32_1 = arith.constant 0 : i32
    return %c0_i32, %c0_i32_0 : i32, i32
  }
  func.func @transform_1(%arg0: i32) -> (i32, i32) {
    %c0_i32 = arith.constant 0 : i32
    %c0_i32_0 = arith.constant 0 : i32
    return %arg0, %c0_i32 : i32, i32
  }
  func.func @transform_2(%arg0: i32) -> (i32, i32) {
    %c0_i32 = arith.constant 0 : i32
    %c0_i32_0 = arith.constant 0 : i32
    return %arg0, %c0_i32 : i32, i32
  }
  func.func @transform_3(%arg0: i32) -> (i32, i32, i32) {
    %c0_i32 = arith.constant 0 : i32
    %c0_i32_0 = arith.constant 0 : i32
    %c0_i32_1 = arith.constant 0 : i32
    return %c0_i32, %arg0, %c0_i32_0 : i32, i32, i32
  }
}

</mosaic_0001>

<llo_original>
// kernel: tpu_custom_call.1
$region0: #{tpu_custom_call.1}
  #allocation0 [shape = 'u32[]', space=smem, size = 0x4, offset = 0x4, fixed_abs, tag = 'smem constant byte address 0x4 - core index']
  #allocation1 [shape = 'u32[144,128]{1,0:T(1,128)}', space=vmem, size = 0x12000, scoped, tag = 'internal scratch']
  #allocation4 [shape = 's32[]', space=sflag, size = 0x4, offset = 0, fixed_abs, tag = 'sflag constant byte address 0x0 - dummy sync flag']
  %s0 = inlined_call_operand.vmem [shape: f32[2,256], index: 0, kind: input, shape index: {}]
  %s1 = inlined_call_operand.vmem [shape: f32[96,1], index: 1, kind: input, shape index: {}]
  %s2 = inlined_call_operand.vmem [shape: f32[96,1], index: 2, kind: input, shape index: {}]
  %s3 = inlined_call_operand.hbm [shape: f32[2,96,256], index: 3, kind: output, shape index: {}]
  %s4 = sld [smem:[#allocation0]]
  $region45: #{tpu_custom_call.1} parent=0
    _
  %s6 = ssub.s32 1, %s4
  %s7 = scalar_select 0, %s6, %s4
  $region1: #{tpu_custom_call.1} parent=0
    #allocation2 [shape = 'u8[196608]{0}', space=vmem, size = 0x30000, scoped, tag = 'output window, operand 0']
    #allocation3 [shape = 's32[2]{0}', space=sflag, size = 0x8, scoped, tag = 'scoped memory for tpu_custom_call.1']
    %8 = vsyncpa [#allocation3], 0
    %s9 = scalar_lea.sflag [#allocation3], 1
    %10 = vsyncpa %s9, 0
    loop: start=0, step=1, limit=4
    $region2: #{tpu_custom_call.1} parent=1 // loop_pre_header
      _
    $region3: #{tpu_custom_call.1} parent=1 // loop_header
      %s12 = sphi 0, %s16
      %p13 = scmp.ge.s32.totalorder %s12, 4
      %s20 = sphi 0, %s20
      %s22 = sphi 0, %s20
      %s23 = sphi 0, %s22
      %s37 = sphi 0, %s23
      %s43 = sphi 0, %s45
      %s46 = sphi 0, %s43
      %s47 = sphi 0, %s46
      %s63 = sphi 0, %s47
      %s69 = sphi 0, %s71
      %s72 = sphi 0, %s69
      %s73 = sphi 0, %s72
      %s89 = sphi 0, %s73
      %s95 = sphi 0, %s97
      %s98 = sphi 0, %s95
      %s99 = sphi 0, %s98
      %s115 = sphi 0, %s99
    $region4: #{tpu_custom_call.1} parent=1 // loop_header_branch
      %15 = sbr.rel (%p13) target = $region8
    $region5: #{tpu_custom_call.1} parent=1 // loop_body
      %s17 = ssub.s32 %s12, 1
      %s18 = ssub.s32 %s12, 2
      %s19 = sadd.s32 %s12, 1
      %s21 = sadd.s32 %s20, 1
      %p24 = scmp.eq.s32.totalorder %s12, 1
      %p25 = scmp.ne.s32.totalorder %s20, %s22
      %p26 = scmp.eq.s32.totalorder %s12, 0
      %p27 = por %p25, %p26
      %p28 = scmp.ne.s32.totalorder %s20, %s22
      %p29 = scmp.eq.s32.totalorder %s17, 1
      %p30 = por %p28, %p29
      %p31 = scmp.ne.s32.totalorder %s22, %s23
      %p32 = scmp.eq.s32.totalorder %s17, 0
      %p33 = por %p31, %p32
      %p34 = scmp.ne.s32.totalorder %s22, %s23
      %p35 = scmp.eq.s32.totalorder %s18, 1
      %p36 = por %p34, %p35
      %p38 = scmp.ne.s32.totalorder %s23, %s37
      %p39 = scmp.eq.s32.totalorder %s18, 0
      %p40 = por %p38, %p39
      %s41 = ssub.s32 %s12, %s19
      %p42 = scmp.eq.s32.totalorder %s41, 0
      %s44 = sadd.s32 %s43, 1
      %s45 = scalar_select %p42, %s43, %s44
      %p48 = pneg %p42
      %p49 = scmp.eq.s32.totalorder %s12, 1
      %p50 = por %p48, %p49
      %p51 = scmp.ne.s32.totalorder %s43, %s46
      %p52 = scmp.eq.s32.totalorder %s12, 0
      %p53 = por %p51, %p52
      %p54 = scmp.ne.s32.totalorder %s43, %s46
      %p55 = scmp.eq.s32.totalorder %s17, 1
      %p56 = por %p54, %p55
      %p57 = scmp.ne.s32.totalorder %s46, %s47
      %p58 = scmp.eq.s32.totalorder %s17, 0
      %p59 = por %p57, %p58
      %p60 = scmp.ne.s32.totalorder %s46, %s47
      %p61 = scmp.eq.s32.totalorder %s18, 1
      %p62 = por %p60, %p61
      %p64 = scmp.ne.s32.totalorder %s47, %s63
      %p65 = scmp.eq.s32.totalorder %s18, 0
      %p66 = por %p64, %p65
      %s67 = ssub.s32 %s12, %s19
      %p68 = scmp.eq.s32.totalorder %s67, 0
      %s70 = sadd.s32 %s69, 1
      %s71 = scalar_select %p68, %s69, %s70
      %p74 = pneg %p68
      %p75 = scmp.eq.s32.totalorder %s12, 1
      %p76 = por %p74, %p75
      %p77 = scmp.ne.s32.totalorder %s69, %s72
      %p78 = scmp.eq.s32.totalorder %s12, 0
      %p79 = por %p77, %p78
      %p80 = scmp.ne.s32.totalorder %s69, %s72
      %p81 = scmp.eq.s32.totalorder %s17, 1
      %p82 = por %p80, %p81
      %p83 = scmp.ne.s32.totalorder %s72, %s73
      %p84 = scmp.eq.s32.totalorder %s17, 0
      %p85 = por %p83, %p84
      %p86 = scmp.ne.s32.totalorder %s72, %s73
      %p87 = scmp.eq.s32.totalorder %s18, 1
      %p88 = por %p86, %p87
      %p90 = scmp.ne.s32.totalorder %s73, %s89
      %p91 = scmp.eq.s32.totalorder %s18, 0
      %p92 = por %p90, %p91
      %s93 = ssub.s32 %s12, %s19
      %p94 = scmp.eq.s32.totalorder %s93, 0
      %s96 = sadd.s32 %s95, 1
      %s97 = scalar_select %p94, %s95, %s96
      %p100 = pneg %p94
      %p101 = scmp.eq.s32.totalorder %s12, 1
      %p102 = por %p100, %p101
      %p103 = scmp.ne.s32.totalorder %s95, %s98
      %p104 = scmp.eq.s32.totalorder %s12, 0
      %p105 = por %p103, %p104
      %p106 = scmp.ne.s32.totalorder %s95, %s98
      %p107 = scmp.eq.s32.totalorder %s17, 1
      %p108 = por %p106, %p107
      %p109 = scmp.ne.s32.totalorder %s98, %s99
      %p110 = scmp.eq.s32.totalorder %s17, 0
      %p111 = por %p109, %p110
      %p112 = scmp.ne.s32.totalorder %s98, %s99
      %p113 = scmp.eq.s32.totalorder %s18, 1
      %p114 = por %p112, %p113
      %p116 = scmp.ne.s32.totalorder %s99, %s115
      %p117 = scmp.eq.s32.totalorder %s18, 0
      %p118 = por %p116, %p117
      %p119 = scmp.le.s32.totalorder 1, %s12
      %p120 = scmp.lt.s32.totalorder %s12, 3
      %p121 = pnand %p119, %p120
      %p122 = pneg %p121
      // Predicated region
      $region9: #{tpu_custom_call.1} parent=5 // pred_check
        _
      $region10: #{tpu_custom_call.1} parent=5 // pred_check_branch
        %124 = sbr.rel (%p121) target = $region12
      $region11: #{tpu_custom_call.1} parent=5 // pred_region
        %s125 = ssub.s32 %s12, 1
        // Predicated region
        $region13: #{tpu_custom_call.1} parent=11 // pred_check
          %p126 = pneg %p33
        $region14: #{tpu_custom_call.1} parent=11 // pred_check_branch
          %128 = sbr.rel (%p126) target = $region16
        $region15: #{tpu_custom_call.1} parent=11 // pred_region
          _
        $region16: #{tpu_custom_call.1} parent=11 // pred_fallthru
          _
      $region12: #{tpu_custom_call.1} parent=5 // pred_fallthru
        _
      %p129 = scmp.lt.s32.totalorder %s12, 2
      // Predicated region
      $region17: #{tpu_custom_call.1} parent=5 // pred_check
        %p130 = pneg %p129
      $region18: #{tpu_custom_call.1} parent=5 // pred_check_branch
        %132 = sbr.rel (%p130) target = $region20
      $region19: #{tpu_custom_call.1} parent=5 // pred_region
        // Predicated region
        $region21: #{tpu_custom_call.1} parent=19 // pred_check
          %p133 = pneg %p53
        $region22: #{tpu_custom_call.1} parent=19 // pred_check_branch
          %135 = sbr.rel (%p133) target = $region24
        $region23: #{tpu_custom_call.1} parent=19 // pred_region
          %s136 = smul.u32 6, %s12
          %p137 = scmp.lt.s32.totalorder %s136, 11
          %s138 = scalar_select %p137, %s136, 11
          %s139 = smul.addr %s138, 8
          %s140 = scalar_lea.vmem %s1, %s139
          %s141 = smul.u32 6, %s12
        $region24: #{tpu_custom_call.1} parent=19 // pred_fallthru
          _
        // Predicated region
        $region25: #{tpu_custom_call.1} parent=19 // pred_check
          %p142 = pneg %p79
        $region26: #{tpu_custom_call.1} parent=19 // pred_check_branch
          %144 = sbr.rel (%p142) target = $region28
        $region27: #{tpu_custom_call.1} parent=19 // pred_region
          %s145 = smul.u32 6, %s12
          %p146 = scmp.lt.s32.totalorder %s145, 11
          %s147 = scalar_select %p146, %s145, 11
          %s148 = smul.addr %s147, 8
          %s149 = scalar_lea.vmem %s2, %s148
          %s150 = smul.u32 6, %s12
        $region28: #{tpu_custom_call.1} parent=19 // pred_fallthru
          _
      $region20: #{tpu_custom_call.1} parent=5 // pred_fallthru
        _
      %p151 = scmp.le.s32.totalorder 1, %s12
      %p152 = scmp.lt.s32.totalorder %s12, 3
      %p153 = pnand %p151, %p152
      %p154 = pneg %p153
      // Predicated region
      $region29: #{tpu_custom_call.1} parent=5 // pred_check
        _
      $region30: #{tpu_custom_call.1} parent=5 // pred_check_branch
        %156 = sbr.rel (%p153) target = $region32
      $region31: #{tpu_custom_call.1} parent=5 // pred_region
        %s157 = ssub.s32 %s12, 1
        %p158 = pneg %p33
        %p159 = pneg %p30
        %s160 = smul.u32 6, %s17
        %p161 = scmp.lt.s32.totalorder %s160, 11
        %s162 = scalar_select %p161, %s160, 11
        %s163 = smul.addr %s162, 8
        %s164 = scalar_lea.vmem %s1, %s163
        %p165 = pneg %p59
        %p166 = pneg %p56
        %s167 = smul.u32 6, %s17
        %p168 = scmp.lt.s32.totalorder %s167, 11
        %s169 = scalar_select %p168, %s167, 11
        %s170 = smul.addr %s169, 8
        %s171 = scalar_lea.vmem %s2, %s170
        %p172 = pneg %p85
        %p173 = pneg %p82
        %p174 = pneg %p111
        %p175 = pneg %p108
        %s176 = sand.u32 %s98, 1
        %s177 = scalar_lea.sflag [#allocation3], %s176
        %s178 = sand.u32 %s98, 1
        %s179 = smul.addr %s178, 192
        %s180 = scalar_lea.vmem [#allocation2], %s179
        %s181 = smul.u32 6, %s17
        %p182 = scmp.lt.s32.totalorder %s181, 11
        %s183 = scalar_select %p182, %s181, 11
        %s184 = smul.addr %s183, 8
        %s185 = scalar_lea.vmem %s1, %s184
        %s186 = smul.u32 6, %s17
        %s187 = smul.u32 6, %s17
        %p188 = scmp.lt.s32.totalorder %s187, 11
        %s189 = scalar_select %p188, %s187, 11
        %s190 = smul.addr %s189, 8
        %s191 = scalar_lea.vmem %s2, %s190
        %s192 = smul.u32 6, %s17
        %s193 = smul.u32 6, %s17
        %v194 = vld [vmem:[%s0] sm:$0xf]
        %v195 = vld [vmem:[%s185] sm:$0xff]
        %v196 = vld [vmem:[%s185 + $0x8] sm:$0xff]
        %v197 = vld [vmem:[%s185 + $0x10] sm:$0xff]
        %v198 = vld [vmem:[%s185 + $0x18] sm:$0xff]
        %v199 = vld [vmem:[%s185 + $0x20] sm:$0xff]
        %v200 = vld [vmem:[%s185 + $0x28] sm:$0xff]
        %v201 = vld [vmem:[%s191] sm:$0xff]
        %v202 = vld [vmem:[%s191 + $0x8] sm:$0xff]
        %v203 = vld [vmem:[%s191 + $0x10] sm:$0xff]
        %v204 = vld [vmem:[%s191 + $0x18] sm:$0xff]
        %v205 = vld [vmem:[%s191 + $0x20] sm:$0xff]
        %v206 = vld [vmem:[%s191 + $0x28] sm:$0xff]
        %v209 = vunpack.c.l.s4 1966171168
        %v210 = vunpack.c.0.s8 %v209
        %v211 = vlaneseq
        %v212 = vshrl.u32 %v211, 7
        %v213 = vsub.s32 %v210, %v212
        %v214 = vrot.slane %v194, %v213
        %v215 = vcombine.high %v214, %v214
        %v216 = vlaneseq
        %v217 = vshrl.u32 %v216, 7
        %v218 = vsub.s32 0, %v217
        %v219 = vrot.slane %v214, %v218
        %v220 = vlaneseq
        %v221 = vshrl.u32 %v220, 7
        %v222 = vsub.s32 1, %v221
        %v223 = vrot.slane %v214, %v222
        %v224 = vlaneseq
        %v225 = vshrl.u32 %v224, 7
        %v226 = vsub.s32 0, %v225
        %v227 = vrot.slane %v215, %v226
        %v228 = vlaneseq
        %v229 = vshrl.u32 %v228, 7
        %v230 = vsub.s32 1, %v229
        %v231 = vrot.slane %v215, %v230
        %237 = vset.pattern.permute.xlu0 0
        %238 = vperm.xlu0 %237, %v195
        %v239 = vpop.permute.xlu0 %238
        %242 = vset.pattern.permute.xlu0 0
        %243 = vperm.xlu0 %242, %v196
        %v244 = vpop.permute.xlu0 %243
        %247 = vset.pattern.permute.xlu0 0
        %248 = vperm.xlu0 %247, %v197
        %v249 = vpop.permute.xlu0 %248
        %252 = vset.pattern.permute.xlu0 0
        %253 = vperm.xlu0 %252, %v198
        %v254 = vpop.permute.xlu0 %253
        %257 = vset.pattern.permute.xlu0 0
        %258 = vperm.xlu0 %257, %v199
        %v259 = vpop.permute.xlu0 %258
        %262 = vset.pattern.permute.xlu0 0
        %263 = vperm.xlu0 %262, %v200
        %v264 = vpop.permute.xlu0 %263
        %v266 = vmul.f32 %v219, %v239
        %v267 = vmul.f32 %v223, %v239
        %v268 = vmul.f32 %v219, %v244
        %v269 = vmul.f32 %v223, %v244
        %v270 = vmul.f32 %v219, %v249
        %v271 = vmul.f32 %v223, %v249
        %v272 = vmul.f32 %v219, %v254
        %v273 = vmul.f32 %v223, %v254
        %v274 = vmul.f32 %v219, %v259
        %v275 = vmul.f32 %v223, %v259
        %v276 = vmul.f32 %v219, %v264
        %v277 = vmul.f32 %v223, %v264
        %v278 = vmul.f32 %v227, %v239
        %v279 = vmul.f32 %v231, %v239
        %v280 = vmul.f32 %v227, %v244
        %v281 = vmul.f32 %v231, %v244
        %v282 = vmul.f32 %v227, %v249
        %v283 = vmul.f32 %v231, %v249
        %v284 = vmul.f32 %v227, %v254
        %v285 = vmul.f32 %v231, %v254
        %v286 = vmul.f32 %v227, %v259
        %v287 = vmul.f32 %v231, %v259
        %v288 = vmul.f32 %v227, %v264
        %v289 = vmul.f32 %v231, %v264
        %291 = vset.pattern.permute.xlu0 0
        %292 = vperm.xlu0 %291, %v201
        %v293 = vpop.permute.xlu0 %292
        %296 = vset.pattern.permute.xlu0 0
        %297 = vperm.xlu0 %296, %v202
        %v298 = vpop.permute.xlu0 %297
        %301 = vset.pattern.permute.xlu0 0
        %302 = vperm.xlu0 %301, %v203
        %v303 = vpop.permute.xlu0 %302
        %306 = vset.pattern.permute.xlu0 0
        %307 = vperm.xlu0 %306, %v204
        %v308 = vpop.permute.xlu0 %307
        %311 = vset.pattern.permute.xlu0 0
        %312 = vperm.xlu0 %311, %v205
        %v313 = vpop.permute.xlu0 %312
        %316 = vset.pattern.permute.xlu0 0
        %317 = vperm.xlu0 %316, %v206
        %v318 = vpop.permute.xlu0 %317
        %v320 = vadd.f32 %v266, %v293
        %v321 = vadd.f32 %v267, %v293
        %v322 = vadd.f32 %v268, %v298
        %v323 = vadd.f32 %v269, %v298
        %v324 = vadd.f32 %v270, %v303
        %v325 = vadd.f32 %v271, %v303
        %v326 = vadd.f32 %v272, %v308
        %v327 = vadd.f32 %v273, %v308
        %v328 = vadd.f32 %v274, %v313
        %v329 = vadd.f32 %v275, %v313
        %v330 = vadd.f32 %v276, %v318
        %v331 = vadd.f32 %v277, %v318
        %v332 = vadd.f32 %v278, %v293
        %v333 = vadd.f32 %v279, %v293
        %v334 = vadd.f32 %v280, %v298
        %v335 = vadd.f32 %v281, %v298
        %v336 = vadd.f32 %v282, %v303
        %v337 = vadd.f32 %v283, %v303
        %v338 = vadd.f32 %v284, %v308
        %v339 = vadd.f32 %v285, %v308
        %v340 = vadd.f32 %v286, %v313
        %v341 = vadd.f32 %v287, %v313
        %v342 = vadd.f32 %v288, %v318
        %v343 = vadd.f32 %v289, %v318
        %v344 = vtanh.pop %v320
        %v345 = vtanh.pop %v321
        %v346 = vtanh.pop %v322
        %v347 = vtanh.pop %v323
        %v348 = vtanh.pop %v324
        %v349 = vtanh.pop %v325
        %v350 = vtanh.pop %v326
        %v351 = vtanh.pop %v327
        %v352 = vtanh.pop %v328
        %v353 = vtanh.pop %v329
        %v354 = vtanh.pop %v330
        %v355 = vtanh.pop %v331
        %v356 = vtanh.pop %v332
        %v357 = vtanh.pop %v333
        %v358 = vtanh.pop %v334
        %v359 = vtanh.pop %v335
        %v360 = vtanh.pop %v336
        %v361 = vtanh.pop %v337
        %v362 = vtanh.pop %v338
        %v363 = vtanh.pop %v339
        %v364 = vtanh.pop %v340
        %v365 = vtanh.pop %v341
        %v366 = vtanh.pop %v342
        %v367 = vtanh.pop %v343
        %368 = vst [vmem:[%s180] sm:$0xff] %v344
        %369 = vst [vmem:[%s180 + $0x8] sm:$0xff] %v345
        %370 = vst [vmem:[%s180 + $0x10] sm:$0xff] %v346
        %371 = vst [vmem:[%s180 + $0x18] sm:$0xff] %v347
        %372 = vst [vmem:[%s180 + $0x20] sm:$0xff] %v348
        %373 = vst [vmem:[%s180 + $0x28] sm:$0xff] %v349
        %374 = vst [vmem:[%s180 + $0x30] sm:$0xff] %v350
        %375 = vst [vmem:[%s180 + $0x38] sm:$0xff] %v351
        %376 = vst [vmem:[%s180 + $0x40] sm:$0xff] %v352
        %377 = vst [vmem:[%s180 + $0x48] sm:$0xff] %v353
        %378 = vst [vmem:[%s180 + $0x50] sm:$0xff] %v354
        %379 = vst [vmem:[%s180 + $0x58] sm:$0xff] %v355
        %380 = vst [vmem:[%s180 + $0x60] sm:$0xff] %v356
        %381 = vst [vmem:[%s180 + $0x68] sm:$0xff] %v357
        %382 = vst [vmem:[%s180 + $0x70] sm:$0xff] %v358
        %383 = vst [vmem:[%s180 + $0x78] sm:$0xff] %v359
        %384 = vst [vmem:[%s180 + $0x80] sm:$0xff] %v360
        %385 = vst [vmem:[%s180 + $0x88] sm:$0xff] %v361
        %386 = vst [vmem:[%s180 + $0x90] sm:$0xff] %v362
        %387 = vst [vmem:[%s180 + $0x98] sm:$0xff] %v363
        %388 = vst [vmem:[%s180 + $0xa0] sm:$0xff] %v364
        %389 = vst [vmem:[%s180 + $0xa8] sm:$0xff] %v365
        %390 = vst [vmem:[%s180 + $0xb0] sm:$0xff] %v366
        %391 = vst [vmem:[%s180 + $0xb8] sm:$0xff] %v367
        %s392 = sand.u32 %s98, 1
        %s393 = scalar_lea.sflag [#allocation3], %s392
        %s394 = sand.u32 %s98, 1
        %s395 = smul.addr %s394, 192
        %s396 = scalar_lea.vmem [#allocation2], %s395
        // Predicated region
        $region33: #{tpu_custom_call.1} parent=31 // pred_check
          %p397 = pneg %p108
        $region34: #{tpu_custom_call.1} parent=31 // pred_check_branch
          %399 = sbr.rel (%p397) target = $region36
        $region35: #{tpu_custom_call.1} parent=31 // pred_region
          #allocation5 [shape = 'u32[6]{0}', space=smem, size = 0x18, scoped, tag = 'DMA stride descriptor']
          %s400 = smul.u32 6, %s17
          %s402 = ssub.s32 3072, 3072
          %403 = vsyncadd %s393, %s402
          %s404 = smul.addr %s400, 2
          %s405 = smul.addr %s404, 128
          %s406 = scalar_lea.hbm %s3, %s405
          %s408 = sshll.u32 1, 14
          %s409 = sxor.u32 4294967295, %s408
          %s412 = sshll.u32 7, 18
          %s413 = sxor.u32 4294967295, %s412
          %s414 = sand.u32 0, %s413
          %s416 = sor.u32 %s414, 0
          %s418 = sshll.u32 3, 24
          %s419 = sxor.u32 4294967295, %s418
          %s420 = sand.u32 %s416, %s419
          %s422 = sor.u32 %s420, 0
          %s423 = sshll.u32 %s396, 4
          %s424 = int_to_ptr.vmem [resolvable:$true] %s423
          %430 = sst [smem:[#allocation5]] 1536
          %s431 = scalar_lea.smem [#allocation5], 1
          %432 = sst [smem:[%s431]] 3072
          %s433 = scalar_lea.smem [#allocation5], 2
          %434 = sst [smem:[%s433]] 6
          %s435 = scalar_lea.smem [#allocation5], 3
          %436 = sst [smem:[%s435]] 256
          %s437 = scalar_lea.smem [#allocation5], 4
          %438 = sst [smem:[%s437]] 256
          %s439 = scalar_lea.smem [#allocation5], 5
          %440 = sst [smem:[%s439]] 16
          %442 = dma.general %s424, 3072, %s406, %s393, [#allocation4], [#allocation5], %s422, 0
        $region36: #{tpu_custom_call.1} parent=31 // pred_fallthru
          _
      $region32: #{tpu_custom_call.1} parent=5 // pred_fallthru
        _
      %p443 = scmp.le.s32.totalorder 2, %s12
      // Predicated region
      $region37: #{tpu_custom_call.1} parent=5 // pred_check
        %p444 = pneg %p443
      $region38: #{tpu_custom_call.1} parent=5 // pred_check_branch
        %446 = sbr.rel (%p444) target = $region40
      $region39: #{tpu_custom_call.1} parent=5 // pred_region
        %s447 = ssub.s32 %s12, 2
        // Predicated region
        $region41: #{tpu_custom_call.1} parent=39 // pred_check
          %p448 = pneg %p114
        $region42: #{tpu_custom_call.1} parent=39 // pred_check_branch
          %450 = sbr.rel (%p448) target = $region44
        $region43: #{tpu_custom_call.1} parent=39 // pred_region
          %s451 = sand.u32 %s99, 1
          %s452 = scalar_lea.sflag [#allocation3], %s451
          %s453 = sand.u32 %s99, 1
          %s454 = smul.addr %s453, 192
          %s455 = scalar_lea.vmem [#allocation2], %s454
          %456 = dma.done %s452, 3072
        $region44: #{tpu_custom_call.1} parent=39 // pred_fallthru
          _
      $region40: #{tpu_custom_call.1} parent=5 // pred_fallthru
        _
    $region6: #{tpu_custom_call.1} parent=1 // loop_footer
      %s16 = sadd.s32 1, %s12
    $region7: #{tpu_custom_call.1} parent=1 // loop_footer_branch
      %11 = sbr.rel target = $region3
    $region8: #{tpu_custom_call.1} parent=1 // loop_exit
      _
    %457 = vsyncpa [#allocation3], 1
    %s458 = scalar_lea.sflag [#allocation3], 1
    %459 = vsyncpa %s458, 1

</llo_original>
